<compile_context>
chip_gen: v5e
topology: v5e:2x2
jax: 0.10.0
libtpu: 0.0.40
codegen_flags: <defaults>
</compile_context>

<pallas_src>
import jax
import jax.numpy as jnp
from jax import lax
from jax.experimental import pallas as pl
from jax.experimental.pallas import tpu as pltpu


def classifier_kernel(x_ref, w1_ref, b1_ref, w2_ref, b2_ref, out_ref):
    # fc1 + folded BatchNorm + bias: (TB, D) @ (D, H) + (1, H)
    h = jnp.dot(x_ref[...], w1_ref[...], preferred_element_type=jnp.float32)
    # ReLU
    h = jnp.maximum(h + b1_ref[...], 0.0)
    # TODO(synk): Dropout(p=0.3) is identity in eval mode; training-mode masking would use
    # pltpu.prng_seed + pltpu.prng_random_bits.
    # fc2 (lane-padded): (TB, H) @ (H, C_pad) + (1, C_pad)
    out_ref[...] = (
        jnp.dot(h, w2_ref[...], preferred_element_type=jnp.float32) + b2_ref[...]
    )


def simple_classifier(x, w1, b1, gamma, beta, running_mean, running_var, w2, b2,
                      *, eps=1e-5, block_b=128):
    B, D = x.shape
    H = w1.shape[1]
    C = w2.shape[1]

    # ---- Fold BatchNorm1d (inference) + fc1 bias into fc1 weights/bias ----
    scale = gamma * lax.rsqrt(running_var + eps)                   # (H,)
    w1_eff = (w1 * scale[None, :]).astype(jnp.float32)             # (D, H)
    b1_eff = ((b1 - running_mean) * scale + beta).reshape(1, H).astype(jnp.float32)

    # ---- Lane-dense output: pad num_classes up to a multiple of 128 ----
    C_pad = max(128, ((C + 127) // 128) * 128)
    w2_pad = jnp.zeros((H, C_pad), jnp.float32).at[:, :C].set(w2)
    b2_pad = jnp.zeros((1, C_pad), jnp.float32).at[0, :C].set(b2)

    # ---- Batch tiling: TB is a multiple of 8 (sublane), up to block_b rows ----
    TB = min(block_b, ((B + 7) // 8) * 8)
    B_pad = ((B + TB - 1) // TB) * TB
    x_pad = x if B_pad == B else jnp.zeros((B_pad, D), x.dtype).at[:B].set(x)

    grid = (B_pad // TB,)

    out = pl.pallas_call(
        classifier_kernel,
        out_shape=jax.ShapeDtypeStruct((B_pad, C_pad), jnp.float32),
        grid=grid,
        in_specs=[
            pl.BlockSpec((TB, D), lambda i: (i, 0)),       # x batch tile
            pl.BlockSpec((D, H), lambda i: (0, 0)),        # folded fc1 weight
            pl.BlockSpec((1, H), lambda i: (0, 0)),        # folded fc1/BN bias
            pl.BlockSpec((H, C_pad), lambda i: (0, 0)),    # lane-padded fc2 weight
            pl.BlockSpec((1, C_pad), lambda i: (0, 0)),    # lane-padded fc2 bias
        ],
        out_specs=pl.BlockSpec((TB, C_pad), lambda i: (i, 0)),
        compiler_params=pltpu.CompilerParams(
            dimension_semantics=("parallel",),             # batch axis: both TCs on v7x
        ),
    )(x_pad, w1_eff, b1_eff, w2_pad, b2_pad)

    # Strip batch/class padding outside the kernel.
    return out[:B, :C]


def reference(x, w1, b1, gamma, beta, mean, var, w2, b2, eps=1e-5):
    h = x @ w1 + b1[None, :]
    h = gamma[None, :] * (h - mean[None, :]) * lax.rsqrt(var[None, :] + eps) + beta[None, :]
    h = jnp.maximum(h, 0.0)
    return h @ w2 + b2[None, :]


if __name__ == "__main__":
    # batch, input_dim, hidden=256 (fixed by the module), num_classes
    B, D, H, C = 256, 32, 256, 8

    key = jax.random.PRNGKey(0)
    keys = jax.random.split(key, 8)

    # Deterministic PyTorch-style init: Linear weights/biases ~ U(-1/sqrt(fan_in), 1/sqrt(fan_in)).
    bound1 = 1.0 / jnp.sqrt(float(D))
    w1 = jax.random.uniform(keys[0], (D, H), jnp.float32, -bound1, bound1)  # (in, out)
    b1 = jax.random.uniform(keys[1], (H,), jnp.float32, -bound1, bound1)

    bound2 = 1.0 / jnp.sqrt(float(H))
    w2 = jax.random.uniform(keys[2], (H, C), jnp.float32, -bound2, bound2)  # (in, out)
    b2 = jax.random.uniform(keys[3], (C,), jnp.float32, -bound2, bound2)

    # BatchNorm1d params / running stats (non-trivial to exercise the folded math).
    gamma = 1.0 + 0.1 * jax.random.normal(keys[4], (H,), jnp.float32)
    beta = 0.1 * jax.random.normal(keys[5], (H,), jnp.float32)
    running_mean = 0.05 * jax.random.normal(keys[6], (H,), jnp.float32)
    running_var = jnp.abs(1.0 + 0.1 * jax.random.normal(keys[7], (H,), jnp.float32))

    x = jax.random.normal(jax.random.PRNGKey(42), (B, D), jnp.float32)

    out = simple_classifier(x, w1, b1, gamma, beta, running_mean, running_var, w2, b2)
    out = jax.block_until_ready(out)

    ref = reference(x, w1, b1, gamma, beta, running_mean, running_var, w2, b2)
    assert out.shape == (B, C)
    assert jnp.allclose(out, ref, atol=1e-4, rtol=1e-4)
    print("KERNEL_OK")
</pallas_src>

<mosaic_0001>
module attributes {stable_mosaic.version = 11 : i64} {
  func.func @classifier_kernel(%arg0: i32, %arg1: memref<128x32xf32, #tpu.memory_space<vmem>>, %arg2: memref<32x256xf32, #tpu.memory_space<vmem>>, %arg3: memref<1x256xf32, #tpu.memory_space<vmem>>, %arg4: memref<256x128xf32, #tpu.memory_space<vmem>>, %arg5: memref<1x128xf32, #tpu.memory_space<vmem>>, %arg6: memref<128x128xf32, #tpu.memory_space<vmem>>) attributes {dimension_semantics = [#tpu.dimension_semantics<parallel>], iteration_bounds = array<i64: 2>, scalar_prefetch = 0 : i64, scratch_operands = 0 : i64, tpu.core_type = #tpu.core_type<tc>, window_params = [{transform_indices = @transform_0, window_bounds = array<i64: 128, 32>}, {pipeline_mode = #tpu.pipeline_mode<synchronous>, transform_indices = @transform_1, window_bounds = array<i64: 32, 256>}, {pipeline_mode = #tpu.pipeline_mode<synchronous>, transform_indices = @transform_2, window_bounds = array<i64: 1, 256>}, {pipeline_mode = #tpu.pipeline_mode<synchronous>, transform_indices = @transform_3, window_bounds = array<i64: 256, 128>}, {pipeline_mode = #tpu.pipeline_mode<synchronous>, transform_indices = @transform_4, window_bounds = array<i64: 1, 128>}, {transform_indices = @transform_5, window_bounds = array<i64: 128, 128>}]} {
    %c0 = arith.constant 0 : index
    %c0_0 = arith.constant 0 : index
    %0 = vector.load %arg1[%c0, %c0_0] : memref<128x32xf32, #tpu.memory_space<vmem>>, vector<128x32xf32>
    %c0_1 = arith.constant 0 : index
    %c0_2 = arith.constant 0 : index
    %1 = vector.load %arg2[%c0_1, %c0_2] : memref<32x256xf32, #tpu.memory_space<vmem>>, vector<32x256xf32>
    %cst = arith.constant dense<0.000000e+00> : vector<128x256xf32>
    %2 = tpu.matmul %0, %1, %cst {dimension_numbers = #tpu.dot_dimension_numbers<[1], [0], [0], [1], [0, 0, 1, 1], [], []>} : vector<128x32xf32>, vector<32x256xf32>, vector<128x256xf32> -> vector<128x256xf32>
    %c0_3 = arith.constant 0 : index
    %c0_4 = arith.constant 0 : index
    %3 = vector.load %arg3[%c0_3, %c0_4] : memref<1x256xf32, #tpu.memory_space<vmem>>, vector<1x256xf32>
    %4 = vector.broadcast %3 : vector<1x256xf32> to vector<128x256xf32>
    %5 = arith.addf %2, %4 : vector<128x256xf32>
    %cst_5 = arith.constant 0.000000e+00 : f32
    %6 = vector.broadcast %cst_5 : f32 to vector<128x256xf32>
    %7 = arith.maximumf %5, %6 : vector<128x256xf32>
    %c0_6 = arith.constant 0 : index
    %c0_7 = arith.constant 0 : index
    %8 = vector.load %arg4[%c0_6, %c0_7] : memref<256x128xf32, #tpu.memory_space<vmem>>, vector<256x128xf32>
    %cst_8 = arith.constant dense<0.000000e+00> : vector<128x128xf32>
    %9 = tpu.matmul %7, %8, %cst_8 {dimension_numbers = #tpu.dot_dimension_numbers<[1], [0], [0], [1], [0, 0, 1, 1], [], []>} : vector<128x256xf32>, vector<256x128xf32>, vector<128x128xf32> -> vector<128x128xf32>
    %c0_9 = arith.constant 0 : index
    %c0_10 = arith.constant 0 : index
    %10 = vector.load %arg5[%c0_9, %c0_10] : memref<1x128xf32, #tpu.memory_space<vmem>>, vector<1x128xf32>
    %11 = vector.broadcast %10 : vector<1x128xf32> to vector<128x128xf32>
    %12 = arith.addf %9, %11 : vector<128x128xf32>
    %c0_11 = arith.constant 0 : index
    %c0_12 = arith.constant 0 : index
    %13 = vector.load %arg6[%c0_11, %c0_12] : memref<128x128xf32, #tpu.memory_space<vmem>>, vector<128x128xf32>
    tpu.vector_store %arg6[%c0_11, %c0_12], %12 {strides = array<i32>} : memref<128x128xf32, #tpu.memory_space<vmem>>, vector<128x128xf32>,
    return
  }
  func.func @transform_0(%arg0: i32) -> (i32, i32) {
    %c0_i32 = arith.constant 0 : i32
    %c0_i32_0 = arith.constant 0 : i32
    return %arg0, %c0_i32 : i32, i32
  }
  func.func @transform_1(%arg0: i32) -> (i32, i32) {
    %c0_i32 = arith.constant 0 : i32
    %c0_i32_0 = arith.constant 0 : i32
    %c0_i32_1 = arith.constant 0 : i32
    return %c0_i32, %c0_i32_0 : i32, i32
  }
  func.func @transform_2(%arg0: i32) -> (i32, i32) {
    %c0_i32 = arith.constant 0 : i32
    %c0_i32_0 = arith.constant 0 : i32
    %c0_i32_1 = arith.constant 0 : i32
    return %c0_i32, %c0_i32_0 : i32, i32
  }
  func.func @transform_3(%arg0: i32) -> (i32, i32) {
    %c0_i32 = arith.constant 0 : i32
    %c0_i32_0 = arith.constant 0 : i32
    %c0_i32_1 = arith.constant 0 : i32
    return %c0_i32, %c0_i32_0 : i32, i32
  }
  func.func @transform_4(%arg0: i32) -> (i32, i32) {
    %c0_i32 = arith.constant 0 : i32
    %c0_i32_0 = arith.constant 0 : i32
    %c0_i32_1 = arith.constant 0 : i32
    return %c0_i32, %c0_i32_0 : i32, i32
  }
  func.func @transform_5(%arg0: i32) -> (i32, i32) {
    %c0_i32 = arith.constant 0 : i32
    %c0_i32_0 = arith.constant 0 : i32
    return %arg0, %c0_i32 : i32, i32
  }
}

</mosaic_0001>

<llo_original>
// kernel: tpu_custom_call.1
$region0: #{tpu_custom_call.1}
  #allocation0 [shape = 'u32[]', space=smem, size = 0x4, offset = 0x4, fixed_abs, tag = 'smem constant byte address 0x4 - core index']
  #allocation1 [shape = 'u32[72,128]{1,0:T(1,128)}', space=vmem, size = 0x9000, scoped, tag = 'internal scratch']
  %s0 = inlined_call_operand.vmem [shape: f32[256,32], index: 0, kind: input, shape index: {}]
  %s1 = inlined_call_operand.vmem [shape: f32[32,256], index: 1, kind: input, shape index: {}]
  %s2 = inlined_call_operand.vmem [shape: f32[1,256], index: 2, kind: input, shape index: {}]
  %s3 = inlined_call_operand.vmem [shape: f32[256,128], index: 3, kind: input, shape index: {}]
  %s4 = inlined_call_operand.vmem [shape: f32[1,128], index: 4, kind: input, shape index: {}]
  %s5 = inlined_call_operand.hbm [shape: f32[256,128], index: 5, kind: output, shape index: {}]
  %s6 = sld [smem:[#allocation0]]
  $region53: #{tpu_custom_call.1} parent=0
    _
  %s8 = ssub.s32 1, %s6
  %s9 = scalar_select 0, %s8, %s6
  $region1: #{tpu_custom_call.1} parent=0
    #allocation2 [shape = 'u8[131072]{0}', space=vmem, size = 0x20000, scoped, tag = 'output window, operand 0']
    #allocation3 [shape = 's32[2]{0}', space=sflag, size = 0x8, scoped, tag = 'scoped memory for tpu_custom_call.1']
    %10 = vsyncpa [#allocation3], 0
    %s11 = scalar_lea.sflag [#allocation3], 1
    %12 = vsyncpa %s11, 0
    loop: start=0, step=1, limit=4
    $region2: #{tpu_custom_call.1} parent=1 // loop_pre_header
      _
    $region3: #{tpu_custom_call.1} parent=1 // loop_header
      %s14 = sphi 0, %s18
      %p15 = scmp.ge.s32.totalorder %s14, 4
      %s24 = sphi 0, %s26
      %s27 = sphi 0, %s24
      %s28 = sphi 0, %s27
      %s44 = sphi 0, %s28
      %s48 = sphi 0, %s48
      %s50 = sphi 0, %s48
      %s51 = sphi 0, %s50
      %s65 = sphi 0, %s51
      %s69 = sphi 0, %s69
      %s71 = sphi 0, %s69
      %s72 = sphi 0, %s71
      %s86 = sphi 0, %s72
      %s90 = sphi 0, %s90
      %s92 = sphi 0, %s90
      %s93 = sphi 0, %s92
      %s107 = sphi 0, %s93
      %s111 = sphi 0, %s111
      %s113 = sphi 0, %s111
      %s114 = sphi 0, %s113
      %s128 = sphi 0, %s114
      %s134 = sphi 0, %s136
      %s137 = sphi 0, %s134
      %s138 = sphi 0, %s137
      %s154 = sphi 0, %s138
    $region4: #{tpu_custom_call.1} parent=1 // loop_header_branch
      %17 = sbr.rel (%p15) target = $region8
    $region5: #{tpu_custom_call.1} parent=1 // loop_body
      %s19 = ssub.s32 %s14, 1
      %s20 = ssub.s32 %s14, 2
      %s21 = sadd.s32 %s14, 1
      %s22 = ssub.s32 %s14, %s21
      %p23 = scmp.eq.s32.totalorder %s22, 0
      %s25 = sadd.s32 %s24, 1
      %s26 = scalar_select %p23, %s24, %s25
      %p29 = pneg %p23
      %p30 = scmp.eq.s32.totalorder %s14, 1
      %p31 = por %p29, %p30
      %p32 = scmp.ne.s32.totalorder %s24, %s27
      %p33 = scmp.eq.s32.totalorder %s14, 0
      %p34 = por %p32, %p33
      %p35 = scmp.ne.s32.totalorder %s24, %s27
      %p36 = scmp.eq.s32.totalorder %s19, 1
      %p37 = por %p35, %p36
      %p38 = scmp.ne.s32.totalorder %s27, %s28
      %p39 = scmp.eq.s32.totalorder %s19, 0
      %p40 = por %p38, %p39
      %p41 = scmp.ne.s32.totalorder %s27, %s28
      %p42 = scmp.eq.s32.totalorder %s20, 1
      %p43 = por %p41, %p42
      %p45 = scmp.ne.s32.totalorder %s28, %s44
      %p46 = scmp.eq.s32.totalorder %s20, 0
      %p47 = por %p45, %p46
      %s49 = sadd.s32 %s48, 1
      %p52 = scmp.eq.s32.totalorder %s14, 1
      %p53 = scmp.ne.s32.totalorder %s48, %s50
      %p54 = scmp.eq.s32.totalorder %s14, 0
      %p55 = por %p53, %p54
      %p56 = scmp.ne.s32.totalorder %s48, %s50
      %p57 = scmp.eq.s32.totalorder %s19, 1
      %p58 = por %p56, %p57
      %p59 = scmp.ne.s32.totalorder %s50, %s51
      %p60 = scmp.eq.s32.totalorder %s19, 0
      %p61 = por %p59, %p60
      %p62 = scmp.ne.s32.totalorder %s50, %s51
      %p63 = scmp.eq.s32.totalorder %s20, 1
      %p64 = por %p62, %p63
      %p66 = scmp.ne.s32.totalorder %s51, %s65
      %p67 = scmp.eq.s32.totalorder %s20, 0
      %p68 = por %p66, %p67
      %s70 = sadd.s32 %s69, 1
      %p73 = scmp.eq.s32.totalorder %s14, 1
      %p74 = scmp.ne.s32.totalorder %s69, %s71
      %p75 = scmp.eq.s32.totalorder %s14, 0
      %p76 = por %p74, %p75
      %p77 = scmp.ne.s32.totalorder %s69, %s71
      %p78 = scmp.eq.s32.totalorder %s19, 1
      %p79 = por %p77, %p78
      %p80 = scmp.ne.s32.totalorder %s71, %s72
      %p81 = scmp.eq.s32.totalorder %s19, 0
      %p82 = por %p80, %p81
      %p83 = scmp.ne.s32.totalorder %s71, %s72
      %p84 = scmp.eq.s32.totalorder %s20, 1
      %p85 = por %p83, %p84
      %p87 = scmp.ne.s32.totalorder %s72, %s86
      %p88 = scmp.eq.s32.totalorder %s20, 0
      %p89 = por %p87, %p88
      %s91 = sadd.s32 %s90, 1
      %p94 = scmp.eq.s32.totalorder %s14, 1
      %p95 = scmp.ne.s32.totalorder %s90, %s92
      %p96 = scmp.eq.s32.totalorder %s14, 0
      %p97 = por %p95, %p96
      %p98 = scmp.ne.s32.totalorder %s90, %s92
      %p99 = scmp.eq.s32.totalorder %s19, 1
      %p100 = por %p98, %p99
      %p101 = scmp.ne.s32.totalorder %s92, %s93
      %p102 = scmp.eq.s32.totalorder %s19, 0
      %p103 = por %p101, %p102
      %p104 = scmp.ne.s32.totalorder %s92, %s93
      %p105 = scmp.eq.s32.totalorder %s20, 1
      %p106 = por %p104, %p105
      %p108 = scmp.ne.s32.totalorder %s93, %s107
      %p109 = scmp.eq.s32.totalorder %s20, 0
      %p110 = por %p108, %p109
      %s112 = sadd.s32 %s111, 1
      %p115 = scmp.eq.s32.totalorder %s14, 1
      %p116 = scmp.ne.s32.totalorder %s111, %s113
      %p117 = scmp.eq.s32.totalorder %s14, 0
      %p118 = por %p116, %p117
      %p119 = scmp.ne.s32.totalorder %s111, %s113
      %p120 = scmp.eq.s32.totalorder %s19, 1
      %p121 = por %p119, %p120
      %p122 = scmp.ne.s32.totalorder %s113, %s114
      %p123 = scmp.eq.s32.totalorder %s19, 0
      %p124 = por %p122, %p123
      %p125 = scmp.ne.s32.totalorder %s113, %s114
      %p126 = scmp.eq.s32.totalorder %s20, 1
      %p127 = por %p125, %p126
      %p129 = scmp.ne.s32.totalorder %s114, %s128
      %p130 = scmp.eq.s32.totalorder %s20, 0
      %p131 = por %p129, %p130
      %s132 = ssub.s32 %s14, %s21
      %p133 = scmp.eq.s32.totalorder %s132, 0
      %s135 = sadd.s32 %s134, 1
      %s136 = scalar_select %p133, %s134, %s135
      %p139 = pneg %p133
      %p140 = scmp.eq.s32.totalorder %s14, 1
      %p141 = por %p139, %p140
      %p142 = scmp.ne.s32.totalorder %s134, %s137
      %p143 = scmp.eq.s32.totalorder %s14, 0
      %p144 = por %p142, %p143
      %p145 = scmp.ne.s32.totalorder %s134, %s137
      %p146 = scmp.eq.s32.totalorder %s19, 1
      %p147 = por %p145, %p146
      %p148 = scmp.ne.s32.totalorder %s137, %s138
      %p149 = scmp.eq.s32.totalorder %s19, 0
      %p150 = por %p148, %p149
      %p151 = scmp.ne.s32.totalorder %s137, %s138
      %p152 = scmp.eq.s32.totalorder %s20, 1
      %p153 = por %p151, %p152
      %p155 = scmp.ne.s32.totalorder %s138, %s154
      %p156 = scmp.eq.s32.totalorder %s20, 0
      %p157 = por %p155, %p156
      %p158 = scmp.le.s32.totalorder 1, %s14
      %p159 = scmp.lt.s32.totalorder %s14, 3
      %p160 = pnand %p158, %p159
      %p161 = pneg %p160
      // Predicated region
      $region9: #{tpu_custom_call.1} parent=5 // pred_check
        _
      $region10: #{tpu_custom_call.1} parent=5 // pred_check_branch
        %163 = sbr.rel (%p160) target = $region12
      $region11: #{tpu_custom_call.1} parent=5 // pred_region
        %s164 = ssub.s32 %s14, 1
        // Predicated region
        $region13: #{tpu_custom_call.1} parent=11 // pred_check
          %p165 = pneg %p61
        $region14: #{tpu_custom_call.1} parent=11 // pred_check_branch
          %167 = sbr.rel (%p165) target = $region16
        $region15: #{tpu_custom_call.1} parent=11 // pred_region
          _
        $region16: #{tpu_custom_call.1} parent=11 // pred_fallthru
          _
        // Predicated region
        $region17: #{tpu_custom_call.1} parent=11 // pred_check
          %p168 = pneg %p82
        $region18: #{tpu_custom_call.1} parent=11 // pred_check_branch
          %170 = sbr.rel (%p168) target = $region20
        $region19: #{tpu_custom_call.1} parent=11 // pred_region
          _
        $region20: #{tpu_custom_call.1} parent=11 // pred_fallthru
          _
        // Predicated region
        $region21: #{tpu_custom_call.1} parent=11 // pred_check
          %p171 = pneg %p103
        $region22: #{tpu_custom_call.1} parent=11 // pred_check_branch
          %173 = sbr.rel (%p171) target = $region24
        $region23: #{tpu_custom_call.1} parent=11 // pred_region
          _
        $region24: #{tpu_custom_call.1} parent=11 // pred_fallthru
          _
        // Predicated region
        $region25: #{tpu_custom_call.1} parent=11 // pred_check
          %p174 = pneg %p124
        $region26: #{tpu_custom_call.1} parent=11 // pred_check_branch
          %176 = sbr.rel (%p174) target = $region28
        $region27: #{tpu_custom_call.1} parent=11 // pred_region
          _
        $region28: #{tpu_custom_call.1} parent=11 // pred_fallthru
          _
      $region12: #{tpu_custom_call.1} parent=5 // pred_fallthru
        _
      %p177 = scmp.lt.s32.totalorder %s14, 2
      // Predicated region
      $region29: #{tpu_custom_call.1} parent=5 // pred_check
        %p178 = pneg %p177
      $region30: #{tpu_custom_call.1} parent=5 // pred_check_branch
        %180 = sbr.rel (%p178) target = $region32
      $region31: #{tpu_custom_call.1} parent=5 // pred_region
        // Predicated region
        $region33: #{tpu_custom_call.1} parent=31 // pred_check
          %p181 = pneg %p34
        $region34: #{tpu_custom_call.1} parent=31 // pred_check_branch
          %183 = sbr.rel (%p181) target = $region36
        $region35: #{tpu_custom_call.1} parent=31 // pred_region
          %s184 = smul.u32 16, %s14
          %p185 = scmp.lt.s32.totalorder %s184, 31
          %s186 = scalar_select %p185, %s184, 31
          %s187 = smul.addr %s186, 8
          %s188 = scalar_lea.vmem %s0, %s187
          %s189 = smul.u32 16, %s14
        $region36: #{tpu_custom_call.1} parent=31 // pred_fallthru
          _
      $region32: #{tpu_custom_call.1} parent=5 // pred_fallthru
        _
      %p190 = scmp.le.s32.totalorder 1, %s14
      %p191 = scmp.lt.s32.totalorder %s14, 3
      %p192 = pnand %p190, %p191
      %p193 = pneg %p192
      // Predicated region
      $region37: #{tpu_custom_call.1} parent=5 // pred_check
        _
      $region38: #{tpu_custom_call.1} parent=5 // pred_check_branch
        %195 = sbr.rel (%p192) target = $region40
      $region39: #{tpu_custom_call.1} parent=5 // pred_region
        %s196 = ssub.s32 %s14, 1
        %s197 = smul.u32 16, %s19
        %p198 = scmp.lt.s32.totalorder %s197, 31
        %s199 = scalar_select %p198, %s197, 31
        %s200 = smul.addr %s199, 8
        %s201 = scalar_lea.vmem %s0, %s200
        %p202 = pneg %p40
        %p203 = pneg %p37
        %p204 = pneg %p61
        %p205 = pneg %p58
        %p206 = pneg %p82
        %p207 = pneg %p79
        %p208 = pneg %p103
        %p209 = pneg %p100
        %p210 = pneg %p124
        %p211 = pneg %p121
        %p212 = pneg %p150
        %p213 = pneg %p147
        %s214 = sand.u32 %s137, 1
        %s215 = scalar_lea.sflag [#allocation3], %s214
        %s216 = sand.u32 %s137, 1
        %s217 = smul.addr %s216, 128
        %s218 = scalar_lea.vmem [#allocation2], %s217
        %s219 = smul.u32 16, %s19
        %p220 = scmp.lt.s32.totalorder %s219, 31
        %s221 = scalar_select %p220, %s219, 31
        %s222 = smul.addr %s221, 8
        %s223 = scalar_lea.vmem %s0, %s222
        %s224 = smul.u32 16, %s19
        %s225 = smul.u32 16, %s19
        %v226 = vld [vmem:[%s223] sm:$0xff]
        %v227 = vld [vmem:[%s223 + $0x8] sm:$0xff]
        %v228 = vld [vmem:[%s223 + $0x10] sm:$0xff]
        %v229 = vld [vmem:[%s223 + $0x18] sm:$0xff]
        %v230 = vld [vmem:[%s223 + $0x20] sm:$0xff]
        %v231 = vld [vmem:[%s223 + $0x28] sm:$0xff]
        %v232 = vld [vmem:[%s223 + $0x30] sm:$0xff]
        %v233 = vld [vmem:[%s223 + $0x38] sm:$0xff]
        %v234 = vld [vmem:[%s223 + $0x40] sm:$0xff]
        %v235 = vld [vmem:[%s223 + $0x48] sm:$0xff]
        %v236 = vld [vmem:[%s223 + $0x50] sm:$0xff]
        %v237 = vld [vmem:[%s223 + $0x58] sm:$0xff]
        %v238 = vld [vmem:[%s223 + $0x60] sm:$0xff]
        %v239 = vld [vmem:[%s223 + $0x68] sm:$0xff]
        %v240 = vld [vmem:[%s223 + $0x70] sm:$0xff]
        %v241 = vld [vmem:[%s223 + $0x78] sm:$0xff]
        %v242 = vld [vmem:[%s1] sm:$0xff]
        %v243 = vld [vmem:[%s1 + $0x8] sm:$0xff]
        %v244 = vld [vmem:[%s1 + $0x10] sm:$0xff]
        %v245 = vld [vmem:[%s1 + $0x18] sm:$0xff]
        %v246 = vld [vmem:[%s1 + $0x20] sm:$0xff]
        %v247 = vld [vmem:[%s1 + $0x28] sm:$0xff]
        %v248 = vld [vmem:[%s1 + $0x30] sm:$0xff]
        %v249 = vld [vmem:[%s1 + $0x38] sm:$0xff]
        %v250 = vld [vmem:[%s2] sm:$0x3]
        %v252 = vperm.slane %v250, 0
        %v253 = vperm.slane %v250, 1
        %vm256 = vcmask 261120
        %v258 = vsel %vm256, %v226, 0
        %v261 = vsel %vm256, %v227, 0
        %v264 = vsel %vm256, %v228, 0
        %v267 = vsel %vm256, %v229, 0
        %v270 = vsel %vm256, %v230, 0
        %v273 = vsel %vm256, %v231, 0
        %v276 = vsel %vm256, %v232, 0
        %v279 = vsel %vm256, %v233, 0
        %v282 = vsel %vm256, %v234, 0
        %v285 = vsel %vm256, %v235, 0
        %v288 = vsel %vm256, %v236, 0
        %v291 = vsel %vm256, %v237, 0
        %v294 = vsel %vm256, %v238, 0
        %v297 = vsel %vm256, %v239, 0
        %v300 = vsel %vm256, %v240, 0
        %v303 = vsel %vm256, %v241, 0
        %305 = vmatpush.msra.mxu0 0.0
        %306 = vmatpush.msra.mxu0 0.0
        %307 = vmatpush.msra.mxu0 0.0
        %308 = vmatpush.msra.mxu0 0.0
        %309 = vmatpush.msra.mxu0 0.0
        %310 = vmatpush.msra.mxu0 0.0
        %311 = vmatpush.msra.mxu0 0.0
        %312 = vmatpush.msra.mxu0 0.0
        %313 = vmatpush.msra.mxu0 0.0
        %314 = vmatpush.msra.mxu0 0.0
        %315 = vmatpush.msra.mxu0 0.0
        %316 = vmatpush.msra.mxu0 0.0
        %317 = vmatpush.msra.mxu0 %v248
        %318 = vmatpush.msra.mxu0 %v246
        %319 = vmatpush.msra.mxu0 %v244
        %320 = vmatpush.msra.mxu0 %v242
        %321 = vmatmul.f32.gmra.mxu0 %v258
        %v322 = vpop.f32.mrf.mxu0
        %v323 = vadd.f32 %v252, %v322
        %324 = vmatmul.f32.gmra.mxu0 %v261
        %v325 = vpop.f32.mrf.mxu0
        %v326 = vadd.f32 %v252, %v325
        %327 = vmatmul.f32.gmra.mxu0 %v264
        %v328 = vpop.f32.mrf.mxu0
        %v329 = vadd.f32 %v252, %v328
        %330 = vmatmul.f32.gmra.mxu0 %v267
        %v331 = vpop.f32.mrf.mxu0
        %v332 = vadd.f32 %v252, %v331
        %333 = vmatmul.f32.gmra.mxu0 %v270
        %v334 = vpop.f32.mrf.mxu0
        %v335 = vadd.f32 %v252, %v334
        %336 = vmatmul.f32.gmra.mxu0 %v273
        %v337 = vpop.f32.mrf.mxu0
        %v338 = vadd.f32 %v252, %v337
        %339 = vmatmul.f32.gmra.mxu0 %v276
        %v340 = vpop.f32.mrf.mxu0
        %v341 = vadd.f32 %v252, %v340
        %342 = vmatmul.f32.gmra.mxu0 %v279
        %v343 = vpop.f32.mrf.mxu0
        %v344 = vadd.f32 %v252, %v343
        %345 = vmatmul.f32.gmra.mxu0 %v282
        %v346 = vpop.f32.mrf.mxu0
        %v347 = vadd.f32 %v252, %v346
        %348 = vmatmul.f32.gmra.mxu0 %v285
        %v349 = vpop.f32.mrf.mxu0
        %v350 = vadd.f32 %v252, %v349
        %351 = vmatmul.f32.gmra.mxu0 %v288
        %v352 = vpop.f32.mrf.mxu0
        %v353 = vadd.f32 %v252, %v352
        %354 = vmatmul.f32.gmra.mxu0 %v291
        %v355 = vpop.f32.mrf.mxu0
        %v356 = vadd.f32 %v252, %v355
        %357 = vmatmul.f32.gmra.mxu0 %v294
        %v358 = vpop.f32.mrf.mxu0
        %v359 = vadd.f32 %v252, %v358
        %360 = vmatmul.f32.gmra.mxu0 %v297
        %v361 = vpop.f32.mrf.mxu0
        %v362 = vadd.f32 %v252, %v361
        %363 = vmatmul.f32.gmra.mxu0 %v300
        %v364 = vpop.f32.mrf.mxu0
        %v365 = vadd.f32 %v252, %v364
        %366 = vmatmul.f32.gmra.mxu0 %v303
        %v367 = vpop.f32.mrf.mxu0
        %v368 = vadd.f32 %v252, %v367
        %369 = vdwg.mxu0
        %370 = vmatpush.msra.mxu0 0.0
        %371 = vmatpush.msra.mxu0 0.0
        %372 = vmatpush.msra.mxu0 0.0
        %373 = vmatpush.msra.mxu0 0.0
        %374 = vmatpush.msra.mxu0 0.0
        %375 = vmatpush.msra.mxu0 0.0
        %376 = vmatpush.msra.mxu0 0.0
        %377 = vmatpush.msra.mxu0 0.0
        %378 = vmatpush.msra.mxu0 0.0
        %379 = vmatpush.msra.mxu0 0.0
        %380 = vmatpush.msra.mxu0 0.0
        %381 = vmatpush.msra.mxu0 0.0
        %382 = vmatpush.msra.mxu0 %v249
        %383 = vmatpush.msra.mxu0 %v247
        %384 = vmatpush.msra.mxu0 %v245
        %385 = vmatpush.msra.mxu0 %v243
        %386 = vmatmul.f32.gmra.mxu0 %v258
        %v387 = vpop.f32.mrf.mxu0
        %v388 = vadd.f32 %v253, %v387
        %389 = vmatmul.f32.gmra.mxu0 %v261
        %v390 = vpop.f32.mrf.mxu0
        %v391 = vadd.f32 %v253, %v390
        %392 = vmatmul.f32.gmra.mxu0 %v264
        %v393 = vpop.f32.mrf.mxu0
        %v394 = vadd.f32 %v253, %v393
        %395 = vmatmul.f32.gmra.mxu0 %v267
        %v396 = vpop.f32.mrf.mxu0
        %v397 = vadd.f32 %v253, %v396
        %398 = vmatmul.f32.gmra.mxu0 %v270
        %v399 = vpop.f32.mrf.mxu0
        %v400 = vadd.f32 %v253, %v399
        %401 = vmatmul.f32.gmra.mxu0 %v273
        %v402 = vpop.f32.mrf.mxu0
        %v403 = vadd.f32 %v253, %v402
        %404 = vmatmul.f32.gmra.mxu0 %v276
        %v405 = vpop.f32.mrf.mxu0
        %v406 = vadd.f32 %v253, %v405
        %407 = vmatmul.f32.gmra.mxu0 %v279
        %v408 = vpop.f32.mrf.mxu0
        %v409 = vadd.f32 %v253, %v408
        %410 = vmatmul.f32.gmra.mxu0 %v282
        %v411 = vpop.f32.mrf.mxu0
        %v412 = vadd.f32 %v253, %v411
        %413 = vmatmul.f32.gmra.mxu0 %v285
        %v414 = vpop.f32.mrf.mxu0
        %v415 = vadd.f32 %v253, %v414
        %416 = vmatmul.f32.gmra.mxu0 %v288
        %v417 = vpop.f32.mrf.mxu0
        %v418 = vadd.f32 %v253, %v417
        %419 = vmatmul.f32.gmra.mxu0 %v291
        %v420 = vpop.f32.mrf.mxu0
        %v421 = vadd.f32 %v253, %v420
        %422 = vmatmul.f32.gmra.mxu0 %v294
        %v423 = vpop.f32.mrf.mxu0
        %v424 = vadd.f32 %v253, %v423
        %425 = vmatmul.f32.gmra.mxu0 %v297
        %v426 = vpop.f32.mrf.mxu0
        %v427 = vadd.f32 %v253, %v426
        %428 = vmatmul.f32.gmra.mxu0 %v300
        %v429 = vpop.f32.mrf.mxu0
        %v430 = vadd.f32 %v253, %v429
        %431 = vmatmul.f32.gmra.mxu0 %v303
        %v432 = vpop.f32.mrf.mxu0
        %v433 = vadd.f32 %v253, %v432
        %434 = vdwg.mxu0
        %v435 = vmax.f32 %v323, 0.0
        %v436 = vmax.f32 %v388, 0.0
        %v437 = vmax.f32 %v326, 0.0
        %v438 = vmax.f32 %v391, 0.0
        %v439 = vmax.f32 %v329, 0.0
        %v440 = vmax.f32 %v394, 0.0
        %v441 = vmax.f32 %v332, 0.0
        %v442 = vmax.f32 %v397, 0.0
        %v443 = vmax.f32 %v335, 0.0
        %v444 = vmax.f32 %v400, 0.0
        %v445 = vmax.f32 %v338, 0.0
        %v446 = vmax.f32 %v403, 0.0
        %v447 = vmax.f32 %v341, 0.0
        %v448 = vmax.f32 %v406, 0.0
        %v449 = vmax.f32 %v344, 0.0
        %v450 = vmax.f32 %v409, 0.0
        %v451 = vmax.f32 %v347, 0.0
        %v452 = vmax.f32 %v412, 0.0
        %v453 = vmax.f32 %v350, 0.0
        %v454 = vmax.f32 %v415, 0.0
        %v455 = vmax.f32 %v353, 0.0
        %v456 = vmax.f32 %v418, 0.0
        %v457 = vmax.f32 %v356, 0.0
        %v458 = vmax.f32 %v421, 0.0
        %v459 = vmax.f32 %v359, 0.0
        %v460 = vmax.f32 %v424, 0.0
        %v461 = vmax.f32 %v362, 0.0
        %v462 = vmax.f32 %v427, 0.0
        %v463 = vmax.f32 %v365, 0.0
        %v464 = vmax.f32 %v430, 0.0
        %v465 = vmax.f32 %v368, 0.0
        %v466 = vmax.f32 %v433, 0.0
        %v467 = vld [vmem:[%s3] sm:$0xff]
        %v468 = vld [vmem:[%s3 + $0x8] sm:$0xff]
        %v469 = vld [vmem:[%s3 + $0x10] sm:$0xff]
        %v470 = vld [vmem:[%s3 + $0x18] sm:$0xff]
        %v471 = vld [vmem:[%s3 + $0x20] sm:$0xff]
        %v472 = vld [vmem:[%s3 + $0x28] sm:$0xff]
        %v473 = vld [vmem:[%s3 + $0x30] sm:$0xff]
        %v474 = vld [vmem:[%s3 + $0x38] sm:$0xff]
        %v475 = vld [vmem:[%s3 + $0x40] sm:$0xff]
        %v476 = vld [vmem:[%s3 + $0x48] sm:$0xff]
        %v477 = vld [vmem:[%s3 + $0x50] sm:$0xff]
        %v478 = vld [vmem:[%s3 + $0x58] sm:$0xff]
        %v479 = vld [vmem:[%s3 + $0x60] sm:$0xff]
        %v480 = vld [vmem:[%s3 + $0x68] sm:$0xff]
        %v481 = vld [vmem:[%s3 + $0x70] sm:$0xff]
        %v482 = vld [vmem:[%s3 + $0x78] sm:$0xff]
        %v483 = vld [vmem:[%s3 + $0x80] sm:$0xff]
        %v484 = vld [vmem:[%s3 + $0x88] sm:$0xff]
        %v485 = vld [vmem:[%s3 + $0x90] sm:$0xff]
        %v486 = vld [vmem:[%s3 + $0x98] sm:$0xff]
        %v487 = vld [vmem:[%s3 + $0xa0] sm:$0xff]
        %v488 = vld [vmem:[%s3 + $0xa8] sm:$0xff]
        %v489 = vld [vmem:[%s3 + $0xb0] sm:$0xff]
        %v490 = vld [vmem:[%s3 + $0xb8] sm:$0xff]
        %v491 = vld [vmem:[%s3 + $0xc0] sm:$0xff]
        %v492 = vld [vmem:[%s3 + $0xc8] sm:$0xff]
        %v493 = vld [vmem:[%s3 + $0xd0] sm:$0xff]
        %v494 = vld [vmem:[%s3 + $0xd8] sm:$0xff]
        %v495 = vld [vmem:[%s3 + $0xe0] sm:$0xff]
        %v496 = vld [vmem:[%s3 + $0xe8] sm:$0xff]
        %v497 = vld [vmem:[%s3 + $0xf0] sm:$0xff]
        %v498 = vld [vmem:[%s3 + $0xf8] sm:$0xff]
        %v499 = vld [vmem:[%s4] sm:$0x1]
        %v501 = vperm.slane %v499, 0
        %503 = vmatpush.msra.mxu0 %v482
        %504 = vmatpush.msra.mxu0 %v481
        %505 = vmatpush.msra.mxu0 %v480
        %506 = vmatpush.msra.mxu0 %v479
        %507 = vmatpush.msra.mxu0 %v478
        %508 = vmatpush.msra.mxu0 %v477
        %509 = vmatpush.msra.mxu0 %v476
        %510 = vmatpush.msra.mxu0 %v475
        %511 = vmatpush.msra.mxu0 %v474
        %512 = vmatpush.msra.mxu0 %v473
        %513 = vmatpush.msra.mxu0 %v472
        %514 = vmatpush.msra.mxu0 %v471
        %515 = vmatpush.msra.mxu0 %v470
        %516 = vmatpush.msra.mxu0 %v469
        %517 = vmatpush.msra.mxu0 %v468
        %518 = vmatpush.msra.mxu0 %v467
        %519 = vmatmul.f32.gmra.mxu0 %v435
        %v520 = vpop.f32.mrf.mxu0
        %v521 = vadd.f32 %v501, %v520
        %522 = vmatmul.f32.gmra.mxu0 %v437
        %v523 = vpop.f32.mrf.mxu0
        %v524 = vadd.f32 %v501, %v523
        %525 = vmatmul.f32.gmra.mxu0 %v439
        %v526 = vpop.f32.mrf.mxu0
        %v527 = vadd.f32 %v501, %v526
        %528 = vmatmul.f32.gmra.mxu0 %v441
        %v529 = vpop.f32.mrf.mxu0
        %v530 = vadd.f32 %v501, %v529
        %531 = vmatmul.f32.gmra.mxu0 %v443
        %v532 = vpop.f32.mrf.mxu0
        %v533 = vadd.f32 %v501, %v532
        %534 = vmatmul.f32.gmra.mxu0 %v445
        %v535 = vpop.f32.mrf.mxu0
        %v536 = vadd.f32 %v501, %v535
        %537 = vmatmul.f32.gmra.mxu0 %v447
        %v538 = vpop.f32.mrf.mxu0
        %v539 = vadd.f32 %v501, %v538
        %540 = vmatmul.f32.gmra.mxu0 %v449
        %v541 = vpop.f32.mrf.mxu0
        %v542 = vadd.f32 %v501, %v541
        %543 = vmatmul.f32.gmra.mxu0 %v451
        %v544 = vpop.f32.mrf.mxu0
        %v545 = vadd.f32 %v501, %v544
        %546 = vmatmul.f32.gmra.mxu0 %v453
        %v547 = vpop.f32.mrf.mxu0
        %v548 = vadd.f32 %v501, %v547
        %549 = vmatmul.f32.gmra.mxu0 %v455
        %v550 = vpop.f32.mrf.mxu0
        %v551 = vadd.f32 %v501, %v550
        %552 = vmatmul.f32.gmra.mxu0 %v457
        %v553 = vpop.f32.mrf.mxu0
        %v554 = vadd.f32 %v501, %v553
        %555 = vmatmul.f32.gmra.mxu0 %v459
        %v556 = vpop.f32.mrf.mxu0
        %v557 = vadd.f32 %v501, %v556
        %558 = vmatmul.f32.gmra.mxu0 %v461
        %v559 = vpop.f32.mrf.mxu0
        %v560 = vadd.f32 %v501, %v559
        %561 = vmatmul.f32.gmra.mxu0 %v463
        %v562 = vpop.f32.mrf.mxu0
        %v563 = vadd.f32 %v501, %v562
        %564 = vmatmul.f32.gmra.mxu0 %v465
        %v565 = vpop.f32.mrf.mxu0
        %v566 = vadd.f32 %v501, %v565
        %567 = vdwg.mxu0
        %568 = vmatpush.msra.mxu0 %v498
        %569 = vmatpush.msra.mxu0 %v497
        %570 = vmatpush.msra.mxu0 %v496
        %571 = vmatpush.msra.mxu0 %v495
        %572 = vmatpush.msra.mxu0 %v494
        %573 = vmatpush.msra.mxu0 %v493
        %574 = vmatpush.msra.mxu0 %v492
        %575 = vmatpush.msra.mxu0 %v491
        %576 = vmatpush.msra.mxu0 %v490
        %577 = vmatpush.msra.mxu0 %v489
        %578 = vmatpush.msra.mxu0 %v488
        %579 = vmatpush.msra.mxu0 %v487
        %580 = vmatpush.msra.mxu0 %v486
        %581 = vmatpush.msra.mxu0 %v485
        %582 = vmatpush.msra.mxu0 %v484
        %583 = vmatpush.msra.mxu0 %v483
        %584 = vmatmul.f32.gmra.mxu0 %v436
        %v585 = vpop.f32.mrf.mxu0
        %v586 = vadd.f32 %v521, %v585
        %587 = vmatmul.f32.gmra.mxu0 %v438
        %v588 = vpop.f32.mrf.mxu0
        %v589 = vadd.f32 %v524, %v588
        %590 = vmatmul.f32.gmra.mxu0 %v440
        %v591 = vpop.f32.mrf.mxu0
        %v592 = vadd.f32 %v527, %v591
        %593 = vmatmul.f32.gmra.mxu0 %v442
        %v594 = vpop.f32.mrf.mxu0
        %v595 = vadd.f32 %v530, %v594
        %596 = vmatmul.f32.gmra.mxu0 %v444
        %v597 = vpop.f32.mrf.mxu0
        %v598 = vadd.f32 %v533, %v597
        %599 = vmatmul.f32.gmra.mxu0 %v446
        %v600 = vpop.f32.mrf.mxu0
        %v601 = vadd.f32 %v536, %v600
        %602 = vmatmul.f32.gmra.mxu0 %v448
        %v603 = vpop.f32.mrf.mxu0
        %v604 = vadd.f32 %v539, %v603
        %605 = vmatmul.f32.gmra.mxu0 %v450
        %v606 = vpop.f32.mrf.mxu0
        %v607 = vadd.f32 %v542, %v606
        %608 = vmatmul.f32.gmra.mxu0 %v452
        %v609 = vpop.f32.mrf.mxu0
        %v610 = vadd.f32 %v545, %v609
        %611 = vmatmul.f32.gmra.mxu0 %v454
        %v612 = vpop.f32.mrf.mxu0
        %v613 = vadd.f32 %v548, %v612
        %614 = vmatmul.f32.gmra.mxu0 %v456
        %v615 = vpop.f32.mrf.mxu0
        %v616 = vadd.f32 %v551, %v615
        %617 = vmatmul.f32.gmra.mxu0 %v458
        %v618 = vpop.f32.mrf.mxu0
        %v619 = vadd.f32 %v554, %v618
        %620 = vmatmul.f32.gmra.mxu0 %v460
        %v621 = vpop.f32.mrf.mxu0
        %v622 = vadd.f32 %v557, %v621
        %623 = vmatmul.f32.gmra.mxu0 %v462
        %v624 = vpop.f32.mrf.mxu0
        %v625 = vadd.f32 %v560, %v624
        %626 = vmatmul.f32.gmra.mxu0 %v464
        %v627 = vpop.f32.mrf.mxu0
        %v628 = vadd.f32 %v563, %v627
        %629 = vmatmul.f32.gmra.mxu0 %v466
        %v630 = vpop.f32.mrf.mxu0
        %v631 = vadd.f32 %v566, %v630
        %632 = vdwg.mxu0
        %633 = vst [vmem:[%s218] sm:$0xff] %v586
        %634 = vst [vmem:[%s218 + $0x8] sm:$0xff] %v589
        %635 = vst [vmem:[%s218 + $0x10] sm:$0xff] %v592
        %636 = vst [vmem:[%s218 + $0x18] sm:$0xff] %v595
        %637 = vst [vmem:[%s218 + $0x20] sm:$0xff] %v598
        %638 = vst [vmem:[%s218 + $0x28] sm:$0xff] %v601
        %639 = vst [vmem:[%s218 + $0x30] sm:$0xff] %v604
        %640 = vst [vmem:[%s218 + $0x38] sm:$0xff] %v607
        %641 = vst [vmem:[%s218 + $0x40] sm:$0xff] %v610
        %642 = vst [vmem:[%s218 + $0x48] sm:$0xff] %v613
        %643 = vst [vmem:[%s218 + $0x50] sm:$0xff] %v616
        %644 = vst [vmem:[%s218 + $0x58] sm:$0xff] %v619
        %645 = vst [vmem:[%s218 + $0x60] sm:$0xff] %v622
        %646 = vst [vmem:[%s218 + $0x68] sm:$0xff] %v625
        %647 = vst [vmem:[%s218 + $0x70] sm:$0xff] %v628
        %648 = vst [vmem:[%s218 + $0x78] sm:$0xff] %v631
        %s649 = sand.u32 %s137, 1
        %s650 = scalar_lea.sflag [#allocation3], %s649
        %s651 = sand.u32 %s137, 1
        %s652 = smul.addr %s651, 128
        %s653 = scalar_lea.vmem [#allocation2], %s652
        // Predicated region
        $region41: #{tpu_custom_call.1} parent=39 // pred_check
          %p654 = pneg %p147
        $region42: #{tpu_custom_call.1} parent=39 // pred_check_branch
          %656 = sbr.rel (%p654) target = $region44
        $region43: #{tpu_custom_call.1} parent=39 // pred_region
          %s657 = smul.u32 16, %s19
          %659 = vsyncadd %s650, 0
          %s660 = smul.addr %s657, 8
          %s661 = scalar_lea.hbm %s5, %s660
          %s662 = sshll.u32 %s653, 4
          %s663 = int_to_ptr.vmem [resolvable:$true] %s662
          %s664 = sshll.u32 %s661, 4
          %s665 = int_to_ptr.hbm [resolvable:$true] %s664
          %670 = dma.vmem_to_hbm [thread:$0]  %s663, 2048, %s665, %s650, 128, 128, 8
        $region44: #{tpu_custom_call.1} parent=39 // pred_fallthru
          _
      $region40: #{tpu_custom_call.1} parent=5 // pred_fallthru
        _
      %p671 = scmp.le.s32.totalorder 2, %s14
      // Predicated region
      $region45: #{tpu_custom_call.1} parent=5 // pred_check
        %p672 = pneg %p671
      $region46: #{tpu_custom_call.1} parent=5 // pred_check_branch
        %674 = sbr.rel (%p672) target = $region48
      $region47: #{tpu_custom_call.1} parent=5 // pred_region
        %s675 = ssub.s32 %s14, 2
        // Predicated region
        $region49: #{tpu_custom_call.1} parent=47 // pred_check
          %p676 = pneg %p153
        $region50: #{tpu_custom_call.1} parent=47 // pred_check_branch
          %678 = sbr.rel (%p676) target = $region52
        $region51: #{tpu_custom_call.1} parent=47 // pred_region
          %s679 = sand.u32 %s138, 1
          %s680 = scalar_lea.sflag [#allocation3], %s679
          %s681 = sand.u32 %s138, 1
          %s682 = smul.addr %s681, 128
          %s683 = scalar_lea.vmem [#allocation2], %s682
          %685 = dma.done %s680, 2048
        $region52: #{tpu_custom_call.1} parent=47 // pred_fallthru
          _
      $region48: #{tpu_custom_call.1} parent=5 // pred_fallthru
        _
    $region6: #{tpu_custom_call.1} parent=1 // loop_footer
      %s18 = sadd.s32 1, %s14
    $region7: #{tpu_custom_call.1} parent=1 // loop_footer_branch
      %13 = sbr.rel target = $region3
    $region8: #{tpu_custom_call.1} parent=1 // loop_exit
      _
    %686 = vsyncpa [#allocation3], 1
    %s687 = scalar_lea.sflag [#allocation3], 1
    %688 = vsyncpa %s687, 1

</llo_original>
